<compile_context>
chip_gen: v7x
topology: tpu7x:2x2x1
jax: 0.10.0
libtpu: 0.0.40
codegen_flags: <defaults>
</compile_context>

<pallas_src>
import jax
import jax.numpy as jnp
from jax.experimental import pallas as pl
from jax.experimental.pallas import tpu as pltpu

HIDDEN1 = 16
HIDDEN2 = 32


def _policy_kernel(x_ref, w1_ref, b1_ref, w2_ref, b2_ref, wh_ref, bh_ref, out_ref):
    # shared_net: Linear -> Tanh -> Linear -> Tanh
    h1 = jnp.tanh(
        jnp.dot(x_ref[...], w1_ref[...], preferred_element_type=jnp.float32)
        + b1_ref[...]
    )
    h2 = jnp.tanh(
        jnp.dot(h1, w2_ref[...], preferred_element_type=jnp.float32) + b2_ref[...]
    )

    # Fused heads: one matmul producing [mean | stddev-pre-activation].
    heads = (
        jnp.dot(h2, wh_ref[...], preferred_element_type=jnp.float32) + bh_ref[...]
    )

    a = heads.shape[1] // 2
    # softplus == torch.log(1 + torch.exp(.)) — applied only to the stddev half
    # via a lane mask (keeps everything lane-aligned, no concat/slice shuffles).
    sp = jnp.log1p(jnp.exp(heads))
    col = jax.lax.broadcasted_iota(jnp.int32, heads.shape, dimension=1)
    out_ref[...] = jnp.where(col < a, heads, sp)


def policy_network_forward(x, params, tile_b=512):
    """x: (B, obs_dims).  params: dict with pre-transposed (in, out) weights.

    Returns (mean, std), each (B, action_dims) float32.
    """
    x = x.astype(jnp.float32)  # mirrors x.float() in the torch forward
    B, obs_dims = x.shape

    w1, b1 = params["w1"], params["b1"]
    w2, b2 = params["w2"], params["b2"]
    A = params["wm"].shape[1]
    # Fuse the two heads into a single (HIDDEN2, 2A) weight / (1, 2A) bias.
    wh = jnp.concatenate([params["wm"], params["ws"]], axis=1)
    bh = jnp.concatenate([params["bm"], params["bs"]], axis=1)

    # Pick a batch tile.  Small batches run as a single block (block == full
    # array, so no (8,128) divisibility issue); large batches use a multiple-of-8
    # tile and get padded up so every grid step sees a full block.
    if B <= tile_b:
        tb, Bp = B, B
    else:
        tb = tile_b  # multiple of 8 (sublane)
        Bp = pl.cdiv(B, tb) * tb
        if Bp != B:
            x = jnp.pad(x, ((0, Bp - B), (0, 0)))

    def resident(arr):
        # Full-array block with a constant index map: stays VMEM-resident.
        return pl.BlockSpec(arr.shape, lambda i: (0, 0))

    out = pl.pallas_call(
        _policy_kernel,
        out_shape=jax.ShapeDtypeStruct((Bp, 2 * A), jnp.float32),
        grid=(Bp // tb,),
        in_specs=[
            pl.BlockSpec((tb, obs_dims), lambda i: (i, 0)),  # x: tiled over batch
            resident(w1), resident(b1),
            resident(w2), resident(b2),
            resident(wh), resident(bh),
        ],
        out_specs=pl.BlockSpec((tb, 2 * A), lambda i: (i, 0)),
        compiler_params=pltpu.CompilerParams(
            dimension_semantics=("parallel",),
        ),
    )(x, w1, b1, w2, b2, wh, bh)

    mean = out[:B, :A]
    std = out[:B, A:]
    return mean, std


def init_params(key, obs_space_dims, action_space_dims):
    """Deterministic synthetic parameters (shapes follow the torch __init__)."""
    ks = jax.random.split(key, 8)

    def lin(kw, kb, fan_in, fan_out):
        bound = 1.0 / jnp.sqrt(jnp.float32(fan_in))
        # stored as (in, out) == torch weight (out, in) transposed
        w = jax.random.uniform(kw, (fan_in, fan_out), jnp.float32, -bound, bound)
        b = jax.random.uniform(kb, (1, fan_out), jnp.float32, -bound, bound)
        return w, b

    w1, b1 = lin(ks[0], ks[1], obs_space_dims, HIDDEN1)
    w2, b2 = lin(ks[2], ks[3], HIDDEN1, HIDDEN2)
    wm, bm = lin(ks[4], ks[5], HIDDEN2, action_space_dims)
    ws, bs = lin(ks[6], ks[7], HIDDEN2, action_space_dims)
    return {"w1": w1, "b1": b1, "w2": w2, "b2": b2,
            "wm": wm, "bm": bm, "ws": ws, "bs": bs}


def _reference(x, params):
    x = x.astype(jnp.float32)
    h1 = jnp.tanh(x @ params["w1"] + params["b1"])
    h2 = jnp.tanh(h1 @ params["w2"] + params["b2"])
    ref_mean = h2 @ params["wm"] + params["bm"]
    ref_std = jnp.log1p(jnp.exp(h2 @ params["ws"] + params["bs"]))
    return ref_mean, ref_std


if __name__ == "__main__":
    key = jax.random.PRNGKey(0)
    k_x, k_x2, k_p = jax.random.split(key, 3)

    obs_space_dims = 8
    action_space_dims = 4
    params = init_params(k_p, obs_space_dims, action_space_dims)

    # Small batch: single-block path.
    batch = 2
    x = jax.random.normal(k_x, (batch, obs_space_dims), jnp.float32)
    mean, std = policy_network_forward(x, params)
    jax.block_until_ready((mean, std))
    ref_mean, ref_std = _reference(x, params)
    assert mean.shape == (batch, action_space_dims)
    assert std.shape == (batch, action_space_dims)
    assert jnp.allclose(mean, ref_mean, atol=1e-5, rtol=1e-5)
    assert jnp.allclose(std, ref_std, atol=1e-5, rtol=1e-5)

    # Larger (non-multiple-of-tile) batch: exercises the batch grid + padding.
    big_batch = 1037
    xb = jax.random.normal(k_x2, (big_batch, obs_space_dims), jnp.float32)
    mean_b, std_b = policy_network_forward(xb, params, tile_b=512)
    jax.block_until_ready((mean_b, std_b))
    ref_mean_b, ref_std_b = _reference(xb, params)
    assert mean_b.shape == (big_batch, action_space_dims)
    assert std_b.shape == (big_batch, action_space_dims)
    assert jnp.allclose(mean_b, ref_mean_b, atol=1e-5, rtol=1e-5)
    assert jnp.allclose(std_b, ref_std_b, atol=1e-5, rtol=1e-5)

    print("KERNEL_OK")
</pallas_src>

<mosaic_0001>
module attributes {stable_mosaic.version = 11 : i64} {
  func.func @_policy_kernel(%arg0: i32, %arg1: memref<2x8xf32, #tpu.memory_space<vmem>>, %arg2: memref<8x16xf32, #tpu.memory_space<vmem>>, %arg3: memref<1x16xf32, #tpu.memory_space<vmem>>, %arg4: memref<16x32xf32, #tpu.memory_space<vmem>>, %arg5: memref<1x32xf32, #tpu.memory_space<vmem>>, %arg6: memref<32x8xf32, #tpu.memory_space<vmem>>, %arg7: memref<1x8xf32, #tpu.memory_space<vmem>>, %arg8: memref<2x8xf32, #tpu.memory_space<vmem>>) attributes {dimension_semantics = [#tpu.dimension_semantics<parallel>], iteration_bounds = array<i64: 1>, scalar_prefetch = 0 : i64, scratch_operands = 0 : i64, tpu.core_type = #tpu.core_type<tc>, window_params = [{transform_indices = @transform_0, window_bounds = array<i64: 2, 8>}, {pipeline_mode = #tpu.pipeline_mode<synchronous>, transform_indices = @transform_1, window_bounds = array<i64: 8, 16>}, {pipeline_mode = #tpu.pipeline_mode<synchronous>, transform_indices = @transform_2, window_bounds = array<i64: 1, 16>}, {pipeline_mode = #tpu.pipeline_mode<synchronous>, transform_indices = @transform_3, window_bounds = array<i64: 16, 32>}, {pipeline_mode = #tpu.pipeline_mode<synchronous>, transform_indices = @transform_4, window_bounds = array<i64: 1, 32>}, {pipeline_mode = #tpu.pipeline_mode<synchronous>, transform_indices = @transform_5, window_bounds = array<i64: 32, 8>}, {pipeline_mode = #tpu.pipeline_mode<synchronous>, transform_indices = @transform_6, window_bounds = array<i64: 1, 8>}, {transform_indices = @transform_7, window_bounds = array<i64: 2, 8>}]} {
    %c0 = arith.constant 0 : index
    %c0_0 = arith.constant 0 : index
    %0 = vector.load %arg1[%c0, %c0_0] : memref<2x8xf32, #tpu.memory_space<vmem>>, vector<2x8xf32>
    %c0_1 = arith.constant 0 : index
    %c0_2 = arith.constant 0 : index
    %1 = vector.load %arg2[%c0_1, %c0_2] : memref<8x16xf32, #tpu.memory_space<vmem>>, vector<8x16xf32>
    %cst = arith.constant dense<0.000000e+00> : vector<2x16xf32>
    %2 = tpu.matmul %0, %1, %cst {dimension_numbers = #tpu.dot_dimension_numbers<[1], [0], [0], [1], [0, 0, 1, 1], [], []>} : vector<2x8xf32>, vector<8x16xf32>, vector<2x16xf32> -> vector<2x16xf32>
    %c0_3 = arith.constant 0 : index
    %c0_4 = arith.constant 0 : index
    %3 = vector.load %arg3[%c0_3, %c0_4] : memref<1x16xf32, #tpu.memory_space<vmem>>, vector<1x16xf32>
    %4 = vector.broadcast %3 : vector<1x16xf32> to vector<2x16xf32>
    %5 = arith.addf %2, %4 : vector<2x16xf32>
    %6 = math.tanh %5 : vector<2x16xf32>
    %c0_5 = arith.constant 0 : index
    %c0_6 = arith.constant 0 : index
    %7 = vector.load %arg4[%c0_5, %c0_6] : memref<16x32xf32, #tpu.memory_space<vmem>>, vector<16x32xf32>
    %cst_7 = arith.constant dense<0.000000e+00> : vector<2x32xf32>
    %8 = tpu.matmul %6, %7, %cst_7 {dimension_numbers = #tpu.dot_dimension_numbers<[1], [0], [0], [1], [0, 0, 1, 1], [], []>} : vector<2x16xf32>, vector<16x32xf32>, vector<2x32xf32> -> vector<2x32xf32>
    %c0_8 = arith.constant 0 : index
    %c0_9 = arith.constant 0 : index
    %9 = vector.load %arg5[%c0_8, %c0_9] : memref<1x32xf32, #tpu.memory_space<vmem>>, vector<1x32xf32>
    %10 = vector.broadcast %9 : vector<1x32xf32> to vector<2x32xf32>
    %11 = arith.addf %8, %10 : vector<2x32xf32>
    %12 = math.tanh %11 : vector<2x32xf32>
    %c0_10 = arith.constant 0 : index
    %c0_11 = arith.constant 0 : index
    %13 = vector.load %arg6[%c0_10, %c0_11] : memref<32x8xf32, #tpu.memory_space<vmem>>, vector<32x8xf32>
    %cst_12 = arith.constant dense<0.000000e+00> : vector<2x8xf32>
    %14 = tpu.matmul %12, %13, %cst_12 {dimension_numbers = #tpu.dot_dimension_numbers<[1], [0], [0], [1], [0, 0, 1, 1], [], []>} : vector<2x32xf32>, vector<32x8xf32>, vector<2x8xf32> -> vector<2x8xf32>
    %c0_13 = arith.constant 0 : index
    %c0_14 = arith.constant 0 : index
    %15 = vector.load %arg7[%c0_13, %c0_14] : memref<1x8xf32, #tpu.memory_space<vmem>>, vector<1x8xf32>
    %16 = vector.broadcast %15 : vector<1x8xf32> to vector<2x8xf32>
    %17 = arith.addf %14, %16 : vector<2x8xf32>
    %18 = math.exp %17 : vector<2x8xf32>
    %19 = math.log1p %18 : vector<2x8xf32>
    %20 = tpu.iota {dimensions = array<i32: 1>} : vector<2x8xi32>
    %c4_i32 = arith.constant 4 : i32
    %21 = vector.broadcast %c4_i32 : i32 to vector<2x8xi32>
    %22 = arith.cmpi slt, %20, %21 : vector<2x8xi32>
    %23 = arith.select %22, %17, %19 : vector<2x8xi1>, vector<2x8xf32>
    %c0_15 = arith.constant 0 : index
    %c0_16 = arith.constant 0 : index
    %24 = vector.load %arg8[%c0_15, %c0_16] : memref<2x8xf32, #tpu.memory_space<vmem>>, vector<2x8xf32>
    tpu.vector_store %arg8[%c0_15, %c0_16], %23 {strides = array<i32>} : memref<2x8xf32, #tpu.memory_space<vmem>>, vector<2x8xf32>,
    return
  }
  func.func @transform_0(%arg0: i32) -> (i32, i32) {
    %c0_i32 = arith.constant 0 : i32
    %c0_i32_0 = arith.constant 0 : i32
    return %arg0, %c0_i32 : i32, i32
  }
  func.func @transform_1(%arg0: i32) -> (i32, i32) {
    %c0_i32 = arith.constant 0 : i32
    %c0_i32_0 = arith.constant 0 : i32
    %c0_i32_1 = arith.constant 0 : i32
    return %c0_i32, %c0_i32_0 : i32, i32
  }
  func.func @transform_2(%arg0: i32) -> (i32, i32) {
    %c0_i32 = arith.constant 0 : i32
    %c0_i32_0 = arith.constant 0 : i32
    %c0_i32_1 = arith.constant 0 : i32
    return %c0_i32, %c0_i32_0 : i32, i32
  }
  func.func @transform_3(%arg0: i32) -> (i32, i32) {
    %c0_i32 = arith.constant 0 : i32
    %c0_i32_0 = arith.constant 0 : i32
    %c0_i32_1 = arith.constant 0 : i32
    return %c0_i32, %c0_i32_0 : i32, i32
  }
  func.func @transform_4(%arg0: i32) -> (i32, i32) {
    %c0_i32 = arith.constant 0 : i32
    %c0_i32_0 = arith.constant 0 : i32
    %c0_i32_1 = arith.constant 0 : i32
    return %c0_i32, %c0_i32_0 : i32, i32
  }
  func.func @transform_5(%arg0: i32) -> (i32, i32) {
    %c0_i32 = arith.constant 0 : i32
    %c0_i32_0 = arith.constant 0 : i32
    %c0_i32_1 = arith.constant 0 : i32
    return %c0_i32, %c0_i32_0 : i32, i32
  }
  func.func @transform_6(%arg0: i32) -> (i32, i32) {
    %c0_i32 = arith.constant 0 : i32
    %c0_i32_0 = arith.constant 0 : i32
    %c0_i32_1 = arith.constant 0 : i32
    return %c0_i32, %c0_i32_0 : i32, i32
  }
  func.func @transform_7(%arg0: i32) -> (i32, i32) {
    %c0_i32 = arith.constant 0 : i32
    %c0_i32_0 = arith.constant 0 : i32
    return %arg0, %c0_i32 : i32, i32
  }
}

</mosaic_0001>

<llo_original>
// kernel: tpu_custom_call.1
$region0: #{tpu_custom_call.1}
  #allocation0 [shape = 'u32[]', space=smem, size = 0x4, offset = 0x4, fixed_abs, tag = 'smem constant byte address 0x4 - core index']
  #allocation1 [shape = 'u32[144,128]{1,0:T(1,128)}', space=vmem, size = 0x12000, scoped, tag = 'internal scratch']
  %s0 = inlined_call_operand.vmem [shape: f32[2,8], index: 0, kind: input, shape index: {}]
  %s1 = inlined_call_operand.vmem [shape: f32[8,16], index: 1, kind: input, shape index: {}]
  %s2 = inlined_call_operand.vmem [shape: f32[1,16], index: 2, kind: input, shape index: {}]
  %s3 = inlined_call_operand.vmem [shape: f32[16,32], index: 3, kind: input, shape index: {}]
  %s4 = inlined_call_operand.vmem [shape: f32[1,32], index: 4, kind: input, shape index: {}]
  %s5 = inlined_call_operand.vmem [shape: f32[32,8], index: 5, kind: input, shape index: {}]
  %s6 = inlined_call_operand.vmem [shape: f32[1,8], index: 6, kind: input, shape index: {}]
  %s7 = inlined_call_operand.hbm [shape: f32[2,8], index: 7, kind: output, shape index: {}]
  %s8 = sld [smem:[#allocation0]]
  $region38: #{tpu_custom_call.1} parent=0
    _
  %s10 = ssub.s32 1, %s8
  %s11 = scalar_select 0, %s10, %s8
  $region1: #{tpu_custom_call.1} parent=0
    #allocation2 [shape = 'u8[1024]{0}', space=vmem, size = 0x400, scoped, tag = 'output window, operand 0, single buffered']
    #allocation3 [shape = 's32[1]{0}', space=sflag, size = 0x4, scoped, tag = 'scoped memory for tpu_custom_call.1']
    %12 = vsyncpa [#allocation3], 0
    // Predicated region
    $region2: #{tpu_custom_call.1} parent=1 // pred_check
      _
    $region3: #{tpu_custom_call.1} parent=1 // pred_check_branch
      %14 = sbr.rel (0) target = $region5
    $region4: #{tpu_custom_call.1} parent=1 // pred_region
      _
    $region5: #{tpu_custom_call.1} parent=1 // pred_fallthru
      _
    // Predicated region
    $region6: #{tpu_custom_call.1} parent=1 // pred_check
      _
    $region7: #{tpu_custom_call.1} parent=1 // pred_check_branch
      %16 = sbr.rel (0) target = $region9
    $region8: #{tpu_custom_call.1} parent=1 // pred_region
      _
    $region9: #{tpu_custom_call.1} parent=1 // pred_fallthru
      _
    // Predicated region
    $region10: #{tpu_custom_call.1} parent=1 // pred_check
      _
    $region11: #{tpu_custom_call.1} parent=1 // pred_check_branch
      %18 = sbr.rel (0) target = $region13
    $region12: #{tpu_custom_call.1} parent=1 // pred_region
      _
    $region13: #{tpu_custom_call.1} parent=1 // pred_fallthru
      _
    // Predicated region
    $region14: #{tpu_custom_call.1} parent=1 // pred_check
      _
    $region15: #{tpu_custom_call.1} parent=1 // pred_check_branch
      %20 = sbr.rel (0) target = $region17
    $region16: #{tpu_custom_call.1} parent=1 // pred_region
      _
    $region17: #{tpu_custom_call.1} parent=1 // pred_fallthru
      _
    // Predicated region
    $region18: #{tpu_custom_call.1} parent=1 // pred_check
      _
    $region19: #{tpu_custom_call.1} parent=1 // pred_check_branch
      %22 = sbr.rel (0) target = $region21
    $region20: #{tpu_custom_call.1} parent=1 // pred_region
      _
    $region21: #{tpu_custom_call.1} parent=1 // pred_fallthru
      _
    // Predicated region
    $region22: #{tpu_custom_call.1} parent=1 // pred_check
      _
    $region23: #{tpu_custom_call.1} parent=1 // pred_check_branch
      %24 = sbr.rel (0) target = $region25
    $region24: #{tpu_custom_call.1} parent=1 // pred_region
      _
    $region25: #{tpu_custom_call.1} parent=1 // pred_fallthru
      _
    // Predicated region
    $region26: #{tpu_custom_call.1} parent=1 // pred_check
      _
    $region27: #{tpu_custom_call.1} parent=1 // pred_check_branch
      %26 = sbr.rel (0) target = $region29
    $region28: #{tpu_custom_call.1} parent=1 // pred_region
      _
    $region29: #{tpu_custom_call.1} parent=1 // pred_fallthru
      _
    %v27 = vld [vmem:[%s0] sm:$0x3]
    %v28 = vld [vmem:[%s1] sm:$0xff]
    %v29 = vld [vmem:[%s2] sm:$0x1]
    %v31 = vlaneseq
    %v32 = vshrl.u32 %v31, 7
    %v33 = vsub.s32 0, %v32
    %v34 = vrot.slane %v29, %v33
    %vm36 = vcmask 64512
    %v38 = vsel %vm36, %v27, 0
    %40 = vmatprep.subr.mxu0 0.0
    %41 = vmatpush1.msra.mxu0 %v28
    %42 = vmatprep.subr.mxu0 0.0
    %43 = vmatpush1.msra.mxu0 0.0
    %44 = vmatprep.subr.mxu0 0.0
    %45 = vmatpush1.msra.mxu0 0.0
    %46 = vmatprep.subr.mxu0 0.0
    %47 = vmatpush1.msra.mxu0 0.0
    %48 = vmatprep.subr.mxu0 0.0
    %49 = vmatpush1.msra.mxu0 0.0
    %50 = vmatprep.subr.mxu0 0.0
    %51 = vmatpush1.msra.mxu0 0.0
    %52 = vmatprep.subr.mxu0 0.0
    %53 = vmatpush1.msra.mxu0 0.0
    %54 = vmatprep.subr.mxu0 0.0
    %55 = vmatpush1.msra.mxu0 0.0
    %56 = vmatprep.subr.mxu0 0.0
    %57 = vmatpush1.msra.mxu0 0.0
    %58 = vmatprep.subr.mxu0 0.0
    %59 = vmatpush1.msra.mxu0 0.0
    %60 = vmatprep.subr.mxu0 0.0
    %61 = vmatpush1.msra.mxu0 0.0
    %62 = vmatprep.subr.mxu0 0.0
    %63 = vmatpush1.msra.mxu0 0.0
    %64 = vmatprep.subr.mxu0 0.0
    %65 = vmatpush1.msra.mxu0 0.0
    %66 = vmatprep.subr.mxu0 0.0
    %67 = vmatpush1.msra.mxu0 0.0
    %68 = vmatprep.subr.mxu0 0.0
    %69 = vmatpush1.msra.mxu0 0.0
    %70 = vmatprep.subr.mxu0 0.0
    %71 = vmatpush1.msra.mxu0 0.0
    %72 = vmatprep.subr.mxu0 0.0
    %73 = vmatpush1.msra.mxu0 0.0
    %74 = vmatprep.subr.mxu0 0.0
    %75 = vmatpush1.msra.mxu0 0.0
    %76 = vmatprep.subr.mxu0 0.0
    %77 = vmatpush1.msra.mxu0 0.0
    %78 = vmatprep.subr.mxu0 0.0
    %79 = vmatpush1.msra.mxu0 0.0
    %80 = vmatprep.subr.mxu0 0.0
    %81 = vmatpush1.msra.mxu0 0.0
    %82 = vmatprep.subr.mxu0 0.0
    %83 = vmatpush1.msra.mxu0 0.0
    %84 = vmatprep.subr.mxu0 0.0
    %85 = vmatpush1.msra.mxu0 0.0
    %86 = vmatprep.subr.mxu0 0.0
    %87 = vmatpush1.msra.mxu0 0.0
    %88 = vmatprep.subr.mxu0 0.0
    %89 = vmatpush1.msra.mxu0 0.0
    %90 = vmatprep.subr.mxu0 0.0
    %91 = vmatpush1.msra.mxu0 0.0
    %92 = vmatprep.subr.mxu0 0.0
    %93 = vmatpush1.msra.mxu0 0.0
    %94 = vmatprep.subr.mxu0 0.0
    %95 = vmatpush1.msra.mxu0 0.0
    %96 = vmatprep.subr.mxu0 0.0
    %97 = vmatpush1.msra.mxu0 0.0
    %98 = vmatprep.subr.mxu0 0.0
    %99 = vmatpush1.msra.mxu0 0.0
    %100 = vmatprep.subr.mxu0 0.0
    %101 = vmatpush1.msra.mxu0 0.0
    %102 = vmatprep.subr.mxu0 0.0
    %103 = vmatpush1.msra.mxu0 0.0
    %104 = vmatprep.mubr.f32.mxu0 0.0
    %105 = vmatmul.mubr.f32.gmra.mrb[0].mxu0 %v38
    %v106 = vpop.f32.mrb[0].mxu0
    %v107 = vadd.f32 %v34, %v106
    %v108 = vpop.f32.mrb[0].mxu0
    %109 = vdwg.mxu0
    %v110 = vtanh.pop %v107
    %v111 = vld [vmem:[%s3] sm:$0xff]
    %v112 = vld [vmem:[%s3 + $0x8] sm:$0xff]
    %v113 = vld [vmem:[%s4] sm:$0x1]
    %v115 = vlaneseq
    %v116 = vshrl.u32 %v115, 7
    %v117 = vsub.s32 0, %v116
    %v118 = vrot.slane %v113, %v117
    %vm120 = vcmask 130048
    %v122 = vsel %vm120, %v110, 0
    %124 = vmatprep.subr.mxu0 0.0
    %125 = vmatpush1.msra.mxu0 %v111
    %126 = vmatprep.subr.mxu0 0.0
    %127 = vmatpush1.msra.mxu0 %v112
    %128 = vmatprep.subr.mxu0 0.0
    %129 = vmatpush1.msra.mxu0 0.0
    %130 = vmatprep.subr.mxu0 0.0
    %131 = vmatpush1.msra.mxu0 0.0
    %132 = vmatprep.subr.mxu0 0.0
    %133 = vmatpush1.msra.mxu0 0.0
    %134 = vmatprep.subr.mxu0 0.0
    %135 = vmatpush1.msra.mxu0 0.0
    %136 = vmatprep.subr.mxu0 0.0
    %137 = vmatpush1.msra.mxu0 0.0
    %138 = vmatprep.subr.mxu0 0.0
    %139 = vmatpush1.msra.mxu0 0.0
    %140 = vmatprep.subr.mxu0 0.0
    %141 = vmatpush1.msra.mxu0 0.0
    %142 = vmatprep.subr.mxu0 0.0
    %143 = vmatpush1.msra.mxu0 0.0
    %144 = vmatprep.subr.mxu0 0.0
    %145 = vmatpush1.msra.mxu0 0.0
    %146 = vmatprep.subr.mxu0 0.0
    %147 = vmatpush1.msra.mxu0 0.0
    %148 = vmatprep.subr.mxu0 0.0
    %149 = vmatpush1.msra.mxu0 0.0
    %150 = vmatprep.subr.mxu0 0.0
    %151 = vmatpush1.msra.mxu0 0.0
    %152 = vmatprep.subr.mxu0 0.0
    %153 = vmatpush1.msra.mxu0 0.0
    %154 = vmatprep.subr.mxu0 0.0
    %155 = vmatpush1.msra.mxu0 0.0
    %156 = vmatprep.subr.mxu0 0.0
    %157 = vmatpush1.msra.mxu0 0.0
    %158 = vmatprep.subr.mxu0 0.0
    %159 = vmatpush1.msra.mxu0 0.0
    %160 = vmatprep.subr.mxu0 0.0
    %161 = vmatpush1.msra.mxu0 0.0
    %162 = vmatprep.subr.mxu0 0.0
    %163 = vmatpush1.msra.mxu0 0.0
    %164 = vmatprep.subr.mxu0 0.0
    %165 = vmatpush1.msra.mxu0 0.0
    %166 = vmatprep.subr.mxu0 0.0
    %167 = vmatpush1.msra.mxu0 0.0
    %168 = vmatprep.subr.mxu0 0.0
    %169 = vmatpush1.msra.mxu0 0.0
    %170 = vmatprep.subr.mxu0 0.0
    %171 = vmatpush1.msra.mxu0 0.0
    %172 = vmatprep.subr.mxu0 0.0
    %173 = vmatpush1.msra.mxu0 0.0
    %174 = vmatprep.subr.mxu0 0.0
    %175 = vmatpush1.msra.mxu0 0.0
    %176 = vmatprep.subr.mxu0 0.0
    %177 = vmatpush1.msra.mxu0 0.0
    %178 = vmatprep.subr.mxu0 0.0
    %179 = vmatpush1.msra.mxu0 0.0
    %180 = vmatprep.subr.mxu0 0.0
    %181 = vmatpush1.msra.mxu0 0.0
    %182 = vmatprep.subr.mxu0 0.0
    %183 = vmatpush1.msra.mxu0 0.0
    %184 = vmatprep.subr.mxu0 0.0
    %185 = vmatpush1.msra.mxu0 0.0
    %186 = vmatprep.subr.mxu0 0.0
    %187 = vmatpush1.msra.mxu0 0.0
    %188 = vmatprep.mubr.f32.mxu0 0.0
    %189 = vmatmul.mubr.f32.gmra.mrb[0].mxu0 %v122
    %v190 = vpop.f32.mrb[0].mxu0
    %v191 = vadd.f32 %v118, %v190
    %v192 = vpop.f32.mrb[0].mxu0
    %193 = vdwg.mxu0
    %v194 = vtanh.pop %v191
    %v195 = vld [vmem:[%s5] sm:$0xff]
    %v196 = vld [vmem:[%s5 + $0x8] sm:$0xff]
    %v197 = vld [vmem:[%s5 + $0x10] sm:$0xff]
    %v198 = vld [vmem:[%s5 + $0x18] sm:$0xff]
    %v199 = vld [vmem:[%s6] sm:$0x1]
    %v201 = vlaneseq
    %v202 = vshrl.u32 %v201, 7
    %v203 = vsub.s32 0, %v202
    %v204 = vrot.slane %v199, %v203
    %vm206 = vcmask 261120
    %v208 = vsel %vm206, %v194, 0
    %210 = vmatprep.subr.mxu0 0.0
    %211 = vmatpush1.msra.mxu0 %v195
    %212 = vmatprep.subr.mxu0 0.0
    %213 = vmatpush1.msra.mxu0 %v196
    %214 = vmatprep.subr.mxu0 0.0
    %215 = vmatpush1.msra.mxu0 %v197
    %216 = vmatprep.subr.mxu0 0.0
    %217 = vmatpush1.msra.mxu0 %v198
    %218 = vmatprep.subr.mxu0 0.0
    %219 = vmatpush1.msra.mxu0 0.0
    %220 = vmatprep.subr.mxu0 0.0
    %221 = vmatpush1.msra.mxu0 0.0
    %222 = vmatprep.subr.mxu0 0.0
    %223 = vmatpush1.msra.mxu0 0.0
    %224 = vmatprep.subr.mxu0 0.0
    %225 = vmatpush1.msra.mxu0 0.0
    %226 = vmatprep.subr.mxu0 0.0
    %227 = vmatpush1.msra.mxu0 0.0
    %228 = vmatprep.subr.mxu0 0.0
    %229 = vmatpush1.msra.mxu0 0.0
    %230 = vmatprep.subr.mxu0 0.0
    %231 = vmatpush1.msra.mxu0 0.0
    %232 = vmatprep.subr.mxu0 0.0
    %233 = vmatpush1.msra.mxu0 0.0
    %234 = vmatprep.subr.mxu0 0.0
    %235 = vmatpush1.msra.mxu0 0.0
    %236 = vmatprep.subr.mxu0 0.0
    %237 = vmatpush1.msra.mxu0 0.0
    %238 = vmatprep.subr.mxu0 0.0
    %239 = vmatpush1.msra.mxu0 0.0
    %240 = vmatprep.subr.mxu0 0.0
    %241 = vmatpush1.msra.mxu0 0.0
    %242 = vmatprep.subr.mxu0 0.0
    %243 = vmatpush1.msra.mxu0 0.0
    %244 = vmatprep.subr.mxu0 0.0
    %245 = vmatpush1.msra.mxu0 0.0
    %246 = vmatprep.subr.mxu0 0.0
    %247 = vmatpush1.msra.mxu0 0.0
    %248 = vmatprep.subr.mxu0 0.0
    %249 = vmatpush1.msra.mxu0 0.0
    %250 = vmatprep.subr.mxu0 0.0
    %251 = vmatpush1.msra.mxu0 0.0
    %252 = vmatprep.subr.mxu0 0.0
    %253 = vmatpush1.msra.mxu0 0.0
    %254 = vmatprep.subr.mxu0 0.0
    %255 = vmatpush1.msra.mxu0 0.0
    %256 = vmatprep.subr.mxu0 0.0
    %257 = vmatpush1.msra.mxu0 0.0
    %258 = vmatprep.subr.mxu0 0.0
    %259 = vmatpush1.msra.mxu0 0.0
    %260 = vmatprep.subr.mxu0 0.0
    %261 = vmatpush1.msra.mxu0 0.0
    %262 = vmatprep.subr.mxu0 0.0
    %263 = vmatpush1.msra.mxu0 0.0
    %264 = vmatprep.subr.mxu0 0.0
    %265 = vmatpush1.msra.mxu0 0.0
    %266 = vmatprep.subr.mxu0 0.0
    %267 = vmatpush1.msra.mxu0 0.0
    %268 = vmatprep.subr.mxu0 0.0
    %269 = vmatpush1.msra.mxu0 0.0
    %270 = vmatprep.subr.mxu0 0.0
    %271 = vmatpush1.msra.mxu0 0.0
    %272 = vmatprep.subr.mxu0 0.0
    %273 = vmatpush1.msra.mxu0 0.0
    %274 = vmatprep.mubr.f32.mxu0 0.0
    %275 = vmatmul.mubr.f32.gmra.mrb[0].mxu0 %v208
    %v276 = vpop.f32.mrb[0].mxu0
    %v277 = vadd.f32 %v204, %v276
    %v278 = vpop.f32.mrb[0].mxu0
    %279 = vdwg.mxu0
    %v280 = vmul.f32 %v277, 1.442695
    %v281 = vpow.pop %v280
    %v282 = vadd.f32 %v281, 1.0
    %v283 = vlog2.pop %v282
    %v284 = vmul.f32 %v283, 0.6931472
    %v285 = vmul.f32 -0.5, %v281
    %v286 = vadd.f32 %v285, 1.0
    %v287 = vmul.f32 %v286, %v281
    %v288 = vand.u32 2147483647, %v281
    %vm289 = vcmp.lt.f32.partialorder %v288, 0.0004427343
    %v290 = vsel %vm289, %v287, %v284
    %v291 = vlaneseq
    %v292 = vand.u32 %v291, 127
    %vm293 = vcmp.lt.s32.totalorder %v292, 4
    %v294 = vsel %vm293, %v277, %v290
    %vm295 = vcmask 58368
    %296 = vst.msk [vmem:[#allocation2] sm:$0x3] %vm295, %v294
    // Predicated region
    $region30: #{tpu_custom_call.1} parent=1 // pred_check
      _
    $region31: #{tpu_custom_call.1} parent=1 // pred_check_branch
      %298 = sbr.rel (0) target = $region33
    $region32: #{tpu_custom_call.1} parent=1 // pred_region
      %s300 = ssub.s32 32, 32
      %301 = vsyncadd [#allocation3], %s300
      %s303 = sshll.u32 [#allocation2], 4
      %s304 = int_to_ptr.vmem [resolvable:$true] %s303
      %306 = dma.vmem_to_hbm [thread:$0]  %s304, 32, %s7, [#allocation3]
    $region33: #{tpu_custom_call.1} parent=1 // pred_fallthru
      _
    // Predicated region
    $region34: #{tpu_custom_call.1} parent=1 // pred_check
      _
    $region35: #{tpu_custom_call.1} parent=1 // pred_check_branch
      %308 = sbr.rel (0) target = $region37
    $region36: #{tpu_custom_call.1} parent=1 // pred_region
      %309 = dma.done [#allocation3], 32
    $region37: #{tpu_custom_call.1} parent=1 // pred_fallthru
      _
    %310 = vsyncpa [#allocation3], 1

</llo_original>
